<compile_context>
chip_gen: v5e
topology: v5e:2x2
jax: 0.10.0
libtpu: 0.0.40
codegen_flags: <defaults>
</compile_context>

<pallas_src>
import numpy as np
import jax
import jax.numpy as jnp
from jax.experimental import pallas as pl
from jax.experimental.pallas import tpu as pltpu


def _round_up(x, m):
    return (x + m - 1) // m * m


def _compiler_params(**kw):
    cls = getattr(pltpu, "CompilerParams", None)
    if cls is None:                               # older jax fallback
        cls = getattr(pltpu, "TPUCompilerParams")
    return cls(**kw)


_VMEM_LIMIT_CACHE = [None]


def _vmem_limit():
    if _VMEM_LIMIT_CACHE[0] is None:
        cap = 128 * 1024 * 1024
        try:
            info = pltpu.get_tpu_info()
            cap = int(getattr(info, "vmem_capacity_bytes", cap))
        except Exception:
            pass
        # leave headroom for compiler scratch: ~48 MiB on v7x, ~100 MiB on v5e/v6e
        _VMEM_LIMIT_CACHE[0] = int(min(cap - 16 * 1024 * 1024,
                                       100 * 1024 * 1024))
    return _VMEM_LIMIT_CACHE[0]


# ---------------------------------------------------------------------------
# Generic tiled matmul (bf16 operands, f32 accumulation).
# ---------------------------------------------------------------------------
def _matmul_kernel(a_ref, b_ref, o_ref, acc_ref):
    @pl.when(pl.program_id(2) == 0)
    def _():
        acc_ref[...] = jnp.zeros_like(acc_ref)

    acc_ref[...] += jnp.dot(a_ref[...], b_ref[...],
                            preferred_element_type=jnp.float32)

    @pl.when(pl.program_id(2) == pl.num_programs(2) - 1)
    def _():
        o_ref[...] = acc_ref[...].astype(o_ref.dtype)


def _pick_tile(dim, preferred, multiple):
    if dim >= preferred:
        return preferred
    return _round_up(dim, multiple)


def pallas_matmul(a, b, out_dtype=jnp.float32):
    M, K = a.shape
    K2, N = b.shape
    assert K == K2
    # 256-wide N/K tiles fill the 2x256^2 MXU on v6e/v7x and remain a multiple
    # of the 4x128^2 v5e MXU; small dims round to bf16-packing-friendly sizes.
    tm = _pick_tile(M, 256, 16)
    tn = _pick_tile(N, 256, 128)
    tk = _pick_tile(K, 256, 128)
    Mp, Kp, Np = _round_up(M, tm), _round_up(K, tk), _round_up(N, tn)
    a = jnp.pad(a.astype(jnp.bfloat16), ((0, Mp - M), (0, Kp - K)))
    b = jnp.pad(b.astype(jnp.bfloat16), ((0, Kp - K), (0, Np - N)))
    out = pl.pallas_call(
        _matmul_kernel,
        out_shape=jax.ShapeDtypeStruct((Mp, Np), out_dtype),
        grid_spec=pltpu.PrefetchScalarGridSpec(
            num_scalar_prefetch=0,
            grid=(Mp // tm, Np // tn, Kp // tk),
            in_specs=[pl.BlockSpec((tm, tk), lambda i, j, k: (i, k)),
                      pl.BlockSpec((tk, tn), lambda i, j, k: (k, j))],
            out_specs=pl.BlockSpec((tm, tn), lambda i, j, k: (i, j)),
            scratch_shapes=[pltpu.VMEM((tm, tn), jnp.float32)]),
        compiler_params=_compiler_params(
            dimension_semantics=("parallel", "parallel", "arbitrary"),
            vmem_limit_bytes=_vmem_limit()),
    )(a, b)
    return out[:M, :N]


# ---------------------------------------------------------------------------
# Segment-scatter aggregation (dest-sorted edges, scalar-prefetched ranges).
# msg: fused bf16 edge messages [e_pad, dp]; loop_term initializes accumulator.
# ---------------------------------------------------------------------------
def _segment_aggregate(msg, dst_blocks, loop_term, graph, dp):
    tm, tk_e = graph["tile_n"], graph["tile_e"]
    n_pad = graph["n_pad"]
    n_tiles, kb = graph["n_tiles"], graph["max_blocks"]

    # Clamp to the tile's own edge-block range: dead k-iterations request the
    # same block again, so Pallas's same-block detection skips their DMAs.
    def edge_map(i, k, starts, counts):
        last = starts[i] + jnp.maximum(counts[i] - 1, 0)
        return (jnp.minimum(starts[i] + k, last), 0)

    def dst_map(i, k, starts, counts):
        last = starts[i] + jnp.maximum(counts[i] - 1, 0)
        return (jnp.minimum(starts[i] + k, last), 0, 0)

    def node_map(i, k, starts, counts):
        return (i, 0)

    def kernel(starts_ref, counts_ref, msg_ref, dst_ref, loop_ref, y_ref):
        i = pl.program_id(0)
        k = pl.program_id(1)

        @pl.when(k == 0)
        def _():
            # self-loop term initializes the resident accumulator block
            y_ref[...] = loop_ref[...]

        @pl.when(k < counts_ref[i])
        def _():
            rows = jax.lax.broadcasted_iota(jnp.int32, (tm, tk_e), 0) + i * tm
            # local one-hot over the node tile's rows; edges whose destination
            # lies outside this tile (boundary blocks / padding) match nothing.
            onehot = (rows == dst_ref[0]).astype(jnp.bfloat16)   # [tm, tk_e]
            y_ref[...] += jnp.dot(onehot, msg_ref[...],
                                  preferred_element_type=jnp.float32)

        @pl.when(k == pl.num_programs(1) - 1)
        def _():
            # out = (agg_in + agg_out + loop_res) / 3   (bias dropped: cancels
            # under the following BatchNorm with gamma=1, beta=0).
            y_ref[...] = y_ref[...] * (1.0 / 3.0)

    return pl.pallas_call(
        kernel,
        out_shape=jax.ShapeDtypeStruct((n_pad, dp), jnp.float32),
        grid_spec=pltpu.PrefetchScalarGridSpec(
            num_scalar_prefetch=2,
            grid=(n_tiles, kb),
            in_specs=[pl.BlockSpec((tk_e, dp), edge_map),
                      pl.BlockSpec((1, 1, tk_e), dst_map),
                      pl.BlockSpec((tm, dp), node_map)],
            out_specs=pl.BlockSpec((tm, dp), node_map)),
        compiler_params=_compiler_params(
            dimension_semantics=("parallel", "arbitrary"),
            vmem_limit_bytes=_vmem_limit()),
    )(graph["starts"], graph["counts"], msg, dst_blocks, loop_term)


# ---------------------------------------------------------------------------
# Two-pass BatchNorm1d (batch statistics) + tanh.
# ---------------------------------------------------------------------------
def _bn_tile(n_pad):
    for t in (1024, 512, 256, 128, 64, 32, 16, 8):
        if t <= n_pad and n_pad % t == 0:
            return t
    return n_pad


def _bn_stats(y, num_ent, tm, dp):
    n_tiles = y.shape[0] // tm

    def kernel(y_ref, stats_ref):
        i = pl.program_id(0)

        @pl.when(i == 0)
        def _():
            stats_ref[...] = jnp.zeros_like(stats_ref)

        rows = jax.lax.broadcasted_iota(jnp.int32, (tm, 1), 0) + i * tm
        ym = jnp.where(rows < num_ent, y_ref[...], 0.0)      # mask padded rows
        stats_ref[0:1, :] += jnp.sum(ym, axis=0, keepdims=True)
        stats_ref[1:2, :] += jnp.sum(ym * ym, axis=0, keepdims=True)

        @pl.when(i == pl.num_programs(0) - 1)
        def _():
            mean = stats_ref[0:1, :] * (1.0 / num_ent)
            var = stats_ref[1:2, :] * (1.0 / num_ent) - mean * mean
            stats_ref[0:1, :] = mean
            stats_ref[1:2, :] = jax.lax.rsqrt(var + 1e-5)

    return pl.pallas_call(
        kernel,
        out_shape=jax.ShapeDtypeStruct((8, dp), jnp.float32),
        grid_spec=pltpu.PrefetchScalarGridSpec(
            num_scalar_prefetch=0,
            grid=(n_tiles,),
            in_specs=[pl.BlockSpec((tm, dp), lambda i: (i, 0))],
            out_specs=pl.BlockSpec((8, dp), lambda i: (0, 0))),
        compiler_params=_compiler_params(
            dimension_semantics=("arbitrary",),
            vmem_limit_bytes=_vmem_limit()),
    )(y)


def _bn_act(y, stats, tm, dp):
    n_tiles = y.shape[0] // tm

    def kernel(y_ref, stats_ref, o_ref):
        mean = stats_ref[0:1, :]
        inv = stats_ref[1:2, :]
        o_ref[...] = jnp.tanh((y_ref[...] - mean) * inv)

    return pl.pallas_call(
        kernel,
        out_shape=jax.ShapeDtypeStruct(y.shape, jnp.float32),
        grid_spec=pltpu.PrefetchScalarGridSpec(
            num_scalar_prefetch=0,
            grid=(n_tiles,),
            in_specs=[pl.BlockSpec((tm, dp), lambda i: (i, 0)),
                      pl.BlockSpec((8, dp), lambda i: (0, 0))],
            out_specs=pl.BlockSpec((tm, dp), lambda i: (i, 0))),
        compiler_params=_compiler_params(
            dimension_semantics=("parallel",),
            vmem_limit_bytes=_vmem_limit()),
    )(y, stats)


# ---------------------------------------------------------------------------
# Graph preprocessing (static per graph): norms, dest-sort, tile block ranges.
# ---------------------------------------------------------------------------
def preprocess_graph(edge_index, edge_type, num_ent, num_rel2, tile_n, tile_e):
    ei = np.asarray(edge_index)
    et = np.asarray(edge_type)
    e_total = ei.shape[1]
    e_half = e_total // 2
    dst, src = ei[0], ei[1]      # x_j = x[edge_index[1]], aggregate at [0]
    half = (np.arange(e_total) >= e_half).astype(np.int64)

    def norm_for(lo, hi):        # matches CompGCN compute_norm per half
        row, col = dst[lo:hi], src[lo:hi]
        deg = np.zeros(num_ent, np.float64)
        np.add.at(deg, row, 1.0)
        dinv = np.where(deg > 0, deg ** -0.5, 0.0)
        return dinv[row] * dinv[col]

    norm = np.concatenate([norm_for(0, e_half), norm_for(e_half, e_total)])

    perm = np.argsort(dst, kind="stable")
    dst_s, src_s = dst[perm], src[perm]
    typ_s, half_s, norm_s = et[perm], half[perm], norm[perm]

    n_pad = _round_up(num_ent, tile_n)
    e_pad = _round_up(max(e_total, 1), tile_e)
    pad = e_pad - e_total
    dst_s = np.concatenate([dst_s.astype(np.int64),
                            np.full(pad, 1 << 30, np.int64)])
    src_s = np.concatenate([src_s.astype(np.int64), np.zeros(pad, np.int64)])
    typ_s = np.concatenate([typ_s.astype(np.int64), np.zeros(pad, np.int64)])
    half_s = np.concatenate([half_s, np.zeros(pad, np.int64)])
    norm_s = np.concatenate([norm_s, np.zeros(pad)])

    nb = e_pad // tile_e
    n_tiles = n_pad // tile_n
    starts = np.zeros(n_tiles, np.int32)
    counts = np.zeros(n_tiles, np.int32)
    real_dst = dst_s[:e_total]
    for i in range(n_tiles):
        lo = np.searchsorted(real_dst, i * tile_n, side="left")
        hi = np.searchsorted(real_dst, (i + 1) * tile_n, side="left")
        if hi > lo:
            starts[i] = lo // tile_e
            counts[i] = (hi - 1) // tile_e + 1 - starts[i]
    max_blocks = max(1, int(counts.max()))

    rel_rows = num_rel2 + 1                 # relation rows incl. loop relation
    gsrc = src_s + half_s * n_pad           # row into [XW_in ; XW_out]
    gtyp = typ_s + half_s * rel_rows        # row into [RW_in ; RW_out]

    return dict(
        n_pad=n_pad, e_pad=e_pad, nb=nb, n_tiles=n_tiles,
        max_blocks=max_blocks, tile_n=tile_n, tile_e=tile_e,
        starts=jnp.asarray(starts, jnp.int32),
        counts=jnp.asarray(counts, jnp.int32),
        gsrc=jnp.asarray(gsrc, jnp.int32),
        gtyp=jnp.asarray(gtyp, jnp.int32),
        norm=jnp.asarray(norm_s, jnp.float32)[:, None],
        dst_blocks=jnp.asarray(dst_s.reshape(nb, 1, tile_e), jnp.int32),
    )


# ---------------------------------------------------------------------------
# One CompGCNConv layer.
# ---------------------------------------------------------------------------
def compgcn_layer(x, rel, layer_params, graph, num_ent):
    dout = layer_params["w_in"].shape[1]
    dp = _round_up(dout, 128)                 # lane-dense feature width
    n_pad = graph["n_pad"]
    num_rel2 = rel.shape[0]

    w_in, w_out = layer_params["w_in"], layer_params["w_out"]
    w_loop, w_rel = layer_params["w_loop"], layer_params["w_rel"]
    loop_rel = layer_params["loop_rel"]                        # [1, din]
    rel_ext = jnp.concatenate([rel, loop_rel], axis=0)         # [R2+1, din]

    def pad_cols(w):
        return jnp.pad(w, ((0, 0), (0, dp - w.shape[1])))

    # Entity-side matmul: one wide RHS [W_in | W_out | W_loop].  bf16 output
    # halves the HBM write and the subsequent gather read.
    wx = jnp.concatenate([pad_cols(w_in), pad_cols(w_out), pad_cols(w_loop)],
                         axis=1)                               # [din, 3*dp]
    x_p = jnp.pad(x, ((0, n_pad - num_ent), (0, 0)))
    xw3 = pallas_matmul(x_p, wx, out_dtype=jnp.bfloat16)       # [n_pad, 3*dp]

    # Relation-side matmuls stay in XLA: a handful of rows padded to an MXU
    # grid would be pure pallas_call launch / padding overhead.
    rw_in = pad_cols(rel_ext @ w_in)                           # [R2+1, dp]
    rw_out = pad_cols(rel_ext @ w_out)                         # [R2+1, dp]
    rw_cat = jnp.concatenate([rw_in, rw_out], axis=0)          # [2*(R2+1), dp]
    loop_w = pad_cols(loop_rel @ w_loop)                       # [1, dp]
    r_new = (rel_ext @ w_rel)[:num_rel2]                       # [R2, dout]

    # self-loop term: (x - loop_rel) @ W_loop = x@W_loop - loop_rel@W_loop
    loop_term = xw3[:, 2 * dp:3 * dp].astype(jnp.float32) - loop_w

    # Fused edge message (XLA fuses gather + sub + scale + cast); one bf16
    # stream into the scatter kernel instead of xw + rw + width-1 norm.
    xw_cat = jnp.concatenate([xw3[:, :dp], xw3[:, dp:2 * dp]], axis=0)
    xw_gat = jnp.take(xw_cat, graph["gsrc"], axis=0).astype(jnp.float32)
    rw_gat = jnp.take(rw_cat, graph["gtyp"], axis=0)
    msg = ((xw_gat - rw_gat) * graph["norm"]).astype(jnp.bfloat16)  # [e_pad, dp]
    # TODO(synk): an in-kernel gather via scalar-prefetched row ids + manual
    # DMA would remove this XLA-side HBM round trip.

    y = _segment_aggregate(msg, graph["dst_blocks"], loop_term, graph, dp)

    bn_tm = _bn_tile(n_pad)            # BN tiles decoupled from graph tile_n
    stats = _bn_stats(y, num_ent, bn_tm, dp)
    x_act = _bn_act(y, stats, bn_tm, dp)

    return x_act[:num_ent, :dout], r_new


def compgcn_base_forward(params, edge_index, edge_type, num_ent,
                         score_func="conve", tile_n=128, tile_e=256):
    r = params["init_rel"]
    if score_func == "transe":
        r = jnp.concatenate([r, -r], axis=0)
    x = params["init_embed"]
    graph = preprocess_graph(edge_index, edge_type, num_ent, r.shape[0],
                             tile_n, tile_e)
    for layer_params in params["layers"]:
        x, r = compgcn_layer(x, r, layer_params, graph, num_ent)
    return x, r


# ---------------------------------------------------------------------------
# Parameter init (matches the PyTorch module's xavier_normal_ scheme).
# ---------------------------------------------------------------------------
def _glorot(key, shape):
    fan_in, fan_out = shape
    std = (2.0 / (fan_in + fan_out)) ** 0.5
    return std * jax.random.normal(key, shape, jnp.float32)


def init_params(key, num_ent, num_rel, init_dim, embed_dim, gcn_layer):
    keys = jax.random.split(key, 2 + 6 * gcn_layer)
    params = {
        "init_embed": _glorot(keys[0], (num_ent, init_dim)),
        # compgcn_num_bases == 0, score_func != 'transe' -> (num_rel*2, init_dim)
        "init_rel": _glorot(keys[1], (num_rel * 2, init_dim)),
        "layers": [],
    }
    for i in range(gcn_layer):
        din = init_dim if i == 0 else embed_dim
        k = keys[2 + 6 * i: 2 + 6 * (i + 1)]
        params["layers"].append({
            "w_in":   _glorot(k[0], (din, embed_dim)),
            "w_out":  _glorot(k[1], (din, embed_dim)),
            "w_loop": _glorot(k[2], (din, embed_dim)),
            "w_rel":  _glorot(k[3], (din, embed_dim)),
            "loop_rel": _glorot(k[4], (1, din)),
            "bias": jnp.zeros((embed_dim,), jnp.float32),   # cancelled by BN
        })
    return params


if __name__ == "__main__":
    NUM_ENT, NUM_REL = 16, 4
    INIT_DIM = EMBED_DIM = 32
    GCN_LAYER = 2
    E = 10

    key = jax.random.PRNGKey(0)
    k_src, k_dst, k_typ, k_par = jax.random.split(key, 4)

    src = jax.random.randint(k_src, (E,), 0, NUM_ENT)
    dst = jax.random.randint(k_dst, (E,), 0, NUM_ENT)
    etype = jax.random.randint(k_typ, (E,), 0, NUM_REL)
    # CompGCN convention: forward edges + reversed edges with relation id offset
    edge_index = jnp.concatenate(
        [jnp.stack([src, dst]), jnp.stack([dst, src])], axis=1)   # [2, 2E]
    edge_type = jnp.concatenate([etype, etype + NUM_REL])          # [2E]

    params = init_params(k_par, NUM_ENT, NUM_REL, INIT_DIM, EMBED_DIM,
                         GCN_LAYER)

    x_out, r_out = compgcn_base_forward(params, edge_index, edge_type, NUM_ENT,
                                        tile_n=128, tile_e=256)
    jax.block_until_ready((x_out, r_out))

    assert x_out.shape == (NUM_ENT, EMBED_DIM)
    assert r_out.shape == (NUM_REL * 2, EMBED_DIM)
    assert bool(jnp.all(jnp.isfinite(x_out))) and bool(jnp.all(jnp.isfinite(r_out)))
    print("KERNEL_OK")
</pallas_src>

<mosaic_0001>
module attributes {stable_mosaic.version = 11 : i64} {
  func.func @_matmul_kernel(%arg0: i32, %arg1: i32, %arg2: i32, %arg3: memref<128x128xbf16, #tpu.memory_space<vmem>>, %arg4: memref<128x256xbf16, #tpu.memory_space<vmem>>, %arg5: memref<128x256xbf16, #tpu.memory_space<vmem>>, %arg6: memref<128x256xf32, #tpu.memory_space<vmem>>) attributes {dimension_semantics = [#tpu.dimension_semantics<parallel>, #tpu.dimension_semantics<parallel>, #tpu.dimension_semantics<arbitrary>], iteration_bounds = array<i64: 1, 2, 1>, scalar_prefetch = 0 : i64, scratch_operands = 1 : i64, tpu.core_type = #tpu.core_type<tc>, window_params = [{transform_indices = @transform_0, window_bounds = array<i64: 128, 128>}, {transform_indices = @transform_1, window_bounds = array<i64: 128, 256>}, {transform_indices = @transform_2, window_bounds = array<i64: 128, 256>}]} {
    %c0_i32 = arith.constant 0 : i32
    %0 = arith.cmpi eq, %arg2, %c0_i32 : i32
    %1 = arith.extui %0 : i1 to i32
    %c0_i32_0 = arith.constant 0 : i32
    %2 = arith.cmpi ne, %1, %c0_i32_0 : i32
    scf.if %2 {
      %cst_10 = arith.constant 0.000000e+00 : f32
      %12 = vector.broadcast %cst_10 : f32 to vector<128x256xf32>
      %c0_11 = arith.constant 0 : index
      %c0_12 = arith.constant 0 : index
      %13 = vector.load %arg6[%c0_11, %c0_12] : memref<128x256xf32, #tpu.memory_space<vmem>>, vector<128x256xf32>
      tpu.vector_store %arg6[%c0_11, %c0_12], %12 {strides = array<i32>} : memref<128x256xf32, #tpu.memory_space<vmem>>, vector<128x256xf32>,
    } else {
    }
    %c0 = arith.constant 0 : index
    %c0_1 = arith.constant 0 : index
    %3 = vector.load %arg6[%c0, %c0_1] : memref<128x256xf32, #tpu.memory_space<vmem>>, vector<128x256xf32>
    %c0_2 = arith.constant 0 : index
    %c0_3 = arith.constant 0 : index
    %4 = vector.load %arg3[%c0_2, %c0_3] : memref<128x128xbf16, #tpu.memory_space<vmem>>, vector<128x128xbf16>
    %c0_4 = arith.constant 0 : index
    %c0_5 = arith.constant 0 : index
    %5 = vector.load %arg4[%c0_4, %c0_5] : memref<128x256xbf16, #tpu.memory_space<vmem>>, vector<128x256xbf16>
    %cst = arith.constant dense<0.000000e+00> : vector<128x256xf32>
    %6 = tpu.matmul %4, %5, %cst {dimension_numbers = #tpu.dot_dimension_numbers<[1], [0], [0], [1], [0, 0, 1, 1], [], []>} : vector<128x128xbf16>, vector<128x256xbf16>, vector<128x256xf32> -> vector<128x256xf32>
    %7 = arith.addf %3, %6 : vector<128x256xf32>
    %c0_6 = arith.constant 0 : index
    %c0_7 = arith.constant 0 : index
    %8 = vector.load %arg6[%c0_6, %c0_7] : memref<128x256xf32, #tpu.memory_space<vmem>>, vector<128x256xf32>
    tpu.vector_store %arg6[%c0_6, %c0_7], %7 {strides = array<i32>} : memref<128x256xf32, #tpu.memory_space<vmem>>, vector<128x256xf32>,
    %c0_i32_8 = arith.constant 0 : i32
    %9 = arith.cmpi eq, %arg2, %c0_i32_8 : i32
    %10 = arith.extui %9 : i1 to i32
    %c0_i32_9 = arith.constant 0 : i32
    %11 = arith.cmpi ne, %10, %c0_i32_9 : i32
    scf.if %11 {
      %c0_10 = arith.constant 0 : index
      %c0_11 = arith.constant 0 : index
      %12 = vector.load %arg6[%c0_10, %c0_11] : memref<128x256xf32, #tpu.memory_space<vmem>>, vector<128x256xf32>
      %13 = arith.truncf %12 : vector<128x256xf32> to vector<128x256xbf16>
      %c0_12 = arith.constant 0 : index
      %c0_13 = arith.constant 0 : index
      %14 = vector.load %arg5[%c0_12, %c0_13] : memref<128x256xbf16, #tpu.memory_space<vmem>>, vector<128x256xbf16>
      tpu.vector_store %arg5[%c0_12, %c0_13], %13 {strides = array<i32>} : memref<128x256xbf16, #tpu.memory_space<vmem>>, vector<128x256xbf16>,
    } else {
    }
    return
  }
  func.func @transform_0(%arg0: i32, %arg1: i32, %arg2: i32) -> (i32, i32) {
    %c0_i32 = arith.constant 0 : i32
    return %arg0, %arg2 : i32, i32
  }
  func.func @transform_1(%arg0: i32, %arg1: i32, %arg2: i32) -> (i32, i32) {
    %c0_i32 = arith.constant 0 : i32
    return %arg2, %arg1 : i32, i32
  }
  func.func @transform_2(%arg0: i32, %arg1: i32, %arg2: i32) -> (i32, i32) {
    %c0_i32 = arith.constant 0 : i32
    return %arg0, %arg1 : i32, i32
  }
}

</mosaic_0001>

<llo_original>
// kernel: tpu_custom_call.1
$region0: #{tpu_custom_call.1}
  #allocation0 [shape = 'u32[]', space=smem, size = 0x4, offset = 0x4, fixed_abs, tag = 'smem constant byte address 0x4 - core index']
  #allocation1 [shape = 'u32[72,128]{1,0:T(1,128)}', space=vmem, size = 0x9000, scoped, tag = 'internal scratch']
  #allocation2 [shape = 'f32[128,256]{1,0:T(8,128)}', space=vmem, size = 0x20000, scoped, tag = 'scratch operand']
  %s0 = inlined_call_operand.hbm [shape: bf16[128,128], index: 0, kind: input, shape index: {}]
  %s1 = inlined_call_operand.hbm [shape: bf16[128,512], index: 1, kind: input, shape index: {}]
  %s2 = inlined_call_operand.hbm [shape: bf16[128,512], index: 2, kind: output, shape index: {}]
  %s3 = sld [smem:[#allocation0]]
  $region57: #{tpu_custom_call.1} parent=0
    _
  %s5 = ssub.s32 1, %s3
  %s6 = scalar_select 0, %s5, %s3
  $region1: #{tpu_custom_call.1} parent=0
    #allocation3 [shape = 'u8[32768]{0}', space=vmem, size = 0x8000, scoped, tag = 'input window, operand 0, single buffered']
    #allocation4 [shape = 's32[2]{0}', space=sflag, size = 0x8, scoped, tag = 'scoped memory for tpu_custom_call.1']
    #allocation5 [shape = 's32[2]{0}', space=sflag, size = 0x8, scoped, tag = 'scoped memory for tpu_custom_call.1']
    #allocation6 [shape = 'u8[131072]{0}', space=vmem, size = 0x20000, scoped, tag = 'input window, operand 1']
    #allocation7 [shape = 's32[2]{0}', space=sflag, size = 0x8, scoped, tag = 'scoped memory for tpu_custom_call.1']
    #allocation8 [shape = 'u8[131072]{0}', space=vmem, size = 0x20000, scoped, tag = 'output window, operand 0']
    %7 = vsyncpa [#allocation4], 0
    %8 = vsyncpa [#allocation7], 0
    %s9 = scalar_lea.sflag [#allocation7], 1
    %10 = vsyncpa %s9, 0
    %11 = vsyncpa [#allocation5], 0
    %s12 = scalar_lea.sflag [#allocation5], 1
    %13 = vsyncpa %s12, 0
    loop: start=0, step=1, limit=4
    $region2: #{tpu_custom_call.1} parent=1 // loop_pre_header
      _
    $region3: #{tpu_custom_call.1} parent=1 // loop_header
      %s15 = sphi 0, %s19
      %p16 = scmp.ge.s32.totalorder %s15, 4
      %s22 = sphi 0, %s41
      %s23 = sphi 0, %s37
      %s24 = sphi 0, %s33
      %s25 = sphi 0, %s22
      %s26 = sphi 0, %s23
      %s27 = sphi 0, %s24
      %s28 = sphi 0, %s25
      %s29 = sphi 0, %s26
      %s30 = sphi 0, %s27
      %s46 = sphi 0, %s48
      %s49 = sphi 0, %s46
      %s50 = sphi 0, %s49
      %s66 = sphi 0, %s50
      %s74 = sphi 0, %s76
      %s77 = sphi 0, %s74
      %s78 = sphi 0, %s77
      %s94 = sphi 0, %s78
      %s102 = sphi 0, %s104
      %s105 = sphi 0, %s102
      %s106 = sphi 0, %s105
      %s122 = sphi 0, %s106
    $region4: #{tpu_custom_call.1} parent=1 // loop_header_branch
      %18 = sbr.rel (%p16) target = $region8
    $region5: #{tpu_custom_call.1} parent=1 // loop_body
      %s20 = ssub.s32 %s15, 1
      %s21 = ssub.s32 %s15, 2
      %s31 = sadd.s32 1, %s24
      %p32 = scmp.ge.s32.totalorder %s31, 1
      %s33 = scalar_select %p32, 0, %s31
      %s34 = sadd.s32 1, %s23
      %s35 = scalar_select %p32, %s34, %s23
      %p36 = scmp.ge.s32.totalorder %s35, 2
      %s37 = scalar_select %p36, 0, %s35
      %s38 = sadd.s32 1, %s22
      %s39 = scalar_select %p36, %s38, %s22
      %p40 = scmp.ge.s32.totalorder %s39, 1
      %s41 = scalar_select %p40, 0, %s39
      %s42 = ssub.s32 %s22, %s41
      %s43 = ssub.s32 %s24, %s33
      %s44 = sor.u32 %s42, %s43
      %p45 = scmp.eq.s32.totalorder %s44, 0
      %s47 = sadd.s32 %s46, 1
      %s48 = scalar_select %p45, %s46, %s47
      %p51 = pneg %p45
      %p52 = scmp.eq.s32.totalorder %s15, 1
      %p53 = por %p51, %p52
      %p54 = scmp.ne.s32.totalorder %s46, %s49
      %p55 = scmp.eq.s32.totalorder %s15, 0
      %p56 = por %p54, %p55
      %p57 = scmp.ne.s32.totalorder %s46, %s49
      %p58 = scmp.eq.s32.totalorder %s20, 1
      %p59 = por %p57, %p58
      %p60 = scmp.ne.s32.totalorder %s49, %s50
      %p61 = scmp.eq.s32.totalorder %s20, 0
      %p62 = por %p60, %p61
      %p63 = scmp.ne.s32.totalorder %s49, %s50
      %p64 = scmp.eq.s32.totalorder %s21, 1
      %p65 = por %p63, %p64
      %p67 = scmp.ne.s32.totalorder %s50, %s66
      %p68 = scmp.eq.s32.totalorder %s21, 0
      %p69 = por %p67, %p68
      %s70 = ssub.s32 %s24, %s33
      %s71 = ssub.s32 %s23, %s37
      %s72 = sor.u32 %s70, %s71
      %p73 = scmp.eq.s32.totalorder %s72, 0
      %s75 = sadd.s32 %s74, 1
      %s76 = scalar_select %p73, %s74, %s75
      %p79 = pneg %p73
      %p80 = scmp.eq.s32.totalorder %s15, 1
      %p81 = por %p79, %p80
      %p82 = scmp.ne.s32.totalorder %s74, %s77
      %p83 = scmp.eq.s32.totalorder %s15, 0
      %p84 = por %p82, %p83
      %p85 = scmp.ne.s32.totalorder %s74, %s77
      %p86 = scmp.eq.s32.totalorder %s20, 1
      %p87 = por %p85, %p86
      %p88 = scmp.ne.s32.totalorder %s77, %s78
      %p89 = scmp.eq.s32.totalorder %s20, 0
      %p90 = por %p88, %p89
      %p91 = scmp.ne.s32.totalorder %s77, %s78
      %p92 = scmp.eq.s32.totalorder %s21, 1
      %p93 = por %p91, %p92
      %p95 = scmp.ne.s32.totalorder %s78, %s94
      %p96 = scmp.eq.s32.totalorder %s21, 0
      %p97 = por %p95, %p96
      %s98 = ssub.s32 %s22, %s41
      %s99 = ssub.s32 %s23, %s37
      %s100 = sor.u32 %s98, %s99
      %p101 = scmp.eq.s32.totalorder %s100, 0
      %s103 = sadd.s32 %s102, 1
      %s104 = scalar_select %p101, %s102, %s103
      %p107 = pneg %p101
      %p108 = scmp.eq.s32.totalorder %s15, 1
      %p109 = por %p107, %p108
      %p110 = scmp.ne.s32.totalorder %s102, %s105
      %p111 = scmp.eq.s32.totalorder %s15, 0
      %p112 = por %p110, %p111
      %p113 = scmp.ne.s32.totalorder %s102, %s105
      %p114 = scmp.eq.s32.totalorder %s20, 1
      %p115 = por %p113, %p114
      %p116 = scmp.ne.s32.totalorder %s105, %s106
      %p117 = scmp.eq.s32.totalorder %s20, 0
      %p118 = por %p116, %p117
      %p119 = scmp.ne.s32.totalorder %s105, %s106
      %p120 = scmp.eq.s32.totalorder %s21, 1
      %p121 = por %p119, %p120
      %p123 = scmp.ne.s32.totalorder %s106, %s122
      %p124 = scmp.eq.s32.totalorder %s21, 0
      %p125 = por %p123, %p124
      %p126 = scmp.le.s32.totalorder 1, %s15
      %p127 = scmp.lt.s32.totalorder %s15, 3
      %p128 = pnand %p126, %p127
      %p129 = pneg %p128
      // Predicated region
      $region9: #{tpu_custom_call.1} parent=5 // pred_check
        _
      $region10: #{tpu_custom_call.1} parent=5 // pred_check_branch
        %131 = sbr.rel (%p128) target = $region12
      $region11: #{tpu_custom_call.1} parent=5 // pred_region
        %s132 = ssub.s32 %s15, 1
        // Predicated region
        $region13: #{tpu_custom_call.1} parent=11 // pred_check
          %p133 = pneg %p62
        $region14: #{tpu_custom_call.1} parent=11 // pred_check_branch
          %135 = sbr.rel (%p133) target = $region16
        $region15: #{tpu_custom_call.1} parent=11 // pred_region
          %s136 = smul.u32 16, %s25
          %138 = vsyncadd [#allocation4], 0
          %s139 = sadd.s32 %s27, %s136
          %s140 = smul.addr %s139, 4
          %s141 = scalar_lea.hbm %s0, %s140
          %s142 = sshll.u32 %s141, 4
          %s143 = int_to_ptr.hbm [resolvable:$true] %s142
          %s144 = sshll.u32 [#allocation3], 4
          %s145 = int_to_ptr.vmem [resolvable:$true] %s144
          %150 = dma.hbm_to_vmem [thread:$0]  %s143, 1024, %s145, [#allocation4], 64, 64, 4
        $region16: #{tpu_custom_call.1} parent=11 // pred_fallthru
          _
      $region12: #{tpu_custom_call.1} parent=5 // pred_fallthru
        _
      %p151 = scmp.lt.s32.totalorder %s15, 2
      // Predicated region
      $region17: #{tpu_custom_call.1} parent=5 // pred_check
        %p152 = pneg %p151
      $region18: #{tpu_custom_call.1} parent=5 // pred_check_branch
        %154 = sbr.rel (%p152) target = $region20
      $region19: #{tpu_custom_call.1} parent=5 // pred_region
        // Predicated region
        $region21: #{tpu_custom_call.1} parent=19 // pred_check
          %p155 = pneg %p84
        $region22: #{tpu_custom_call.1} parent=19 // pred_check_branch
          %157 = sbr.rel (%p155) target = $region24
        $region23: #{tpu_custom_call.1} parent=19 // pred_region
          %s158 = sand.u32 %s74, 1
          %s159 = scalar_lea.sflag [#allocation7], %s158
          %s160 = sand.u32 %s74, 1
          %s161 = smul.addr %s160, 128
          %s162 = scalar_lea.vmem [#allocation6], %s161
          %s163 = smul.u32 16, %s24
          %s164 = smul.u32 2, %s23
          %166 = vsyncadd %s159, 0
          %s167 = smul.addr %s163, 4
          %s168 = sadd.s32 %s164, %s167
          %s169 = smul.addr %s168, 4
          %s170 = scalar_lea.hbm %s1, %s169
          %s171 = sshll.u32 %s170, 4
          %s172 = int_to_ptr.hbm [resolvable:$true] %s171
          %s173 = sshll.u32 %s162, 4
          %s174 = int_to_ptr.vmem [resolvable:$true] %s173
          %179 = dma.hbm_to_vmem [thread:$0]  %s172, 2048, %s174, %s159, 256, 128, 8
        $region24: #{tpu_custom_call.1} parent=19 // pred_fallthru
          _
      $region20: #{tpu_custom_call.1} parent=5 // pred_fallthru
        _
      %p180 = scmp.le.s32.totalorder 1, %s15
      %p181 = scmp.lt.s32.totalorder %s15, 3
      %p182 = pnand %p180, %p181
      %p183 = pneg %p182
      // Predicated region
      $region25: #{tpu_custom_call.1} parent=5 // pred_check
        _
      $region26: #{tpu_custom_call.1} parent=5 // pred_check_branch
        %185 = sbr.rel (%p182) target = $region28
      $region27: #{tpu_custom_call.1} parent=5 // pred_region
        %s186 = ssub.s32 %s15, 1
        // Predicated region
        $region29: #{tpu_custom_call.1} parent=27 // pred_check
          %p187 = pneg %p62
        $region30: #{tpu_custom_call.1} parent=27 // pred_check_branch
          %189 = sbr.rel (%p187) target = $region32
        $region31: #{tpu_custom_call.1} parent=27 // pred_region
          %191 = dma.done [#allocation4], 1024
        $region32: #{tpu_custom_call.1} parent=27 // pred_fallthru
          _
        %s192 = sand.u32 %s77, 1
        %s193 = scalar_lea.sflag [#allocation7], %s192
        %s194 = sand.u32 %s77, 1
        %s195 = smul.addr %s194, 128
        %s196 = scalar_lea.vmem [#allocation6], %s195
        // Predicated region
        $region33: #{tpu_custom_call.1} parent=27 // pred_check
          %p197 = pneg %p90
        $region34: #{tpu_custom_call.1} parent=27 // pred_check_branch
          %199 = sbr.rel (%p197) target = $region36
        $region35: #{tpu_custom_call.1} parent=27 // pred_region
          %201 = dma.done %s193, 2048
        $region36: #{tpu_custom_call.1} parent=27 // pred_fallthru
          _
        %p202 = pneg %p62
        %p203 = pneg %p59
        %s204 = sand.u32 %s77, 1
        %s205 = scalar_lea.sflag [#allocation7], %s204
        %s206 = sand.u32 %s77, 1
        %s207 = smul.addr %s206, 128
        %s208 = scalar_lea.vmem [#allocation6], %s207
        %p209 = pneg %p90
        %p210 = pneg %p87
        %p211 = pneg %p118
        %p212 = pneg %p115
        %s213 = sand.u32 %s105, 1
        %s214 = scalar_lea.sflag [#allocation5], %s213
        %s215 = sand.u32 %s105, 1
        %s216 = smul.addr %s215, 128
        %s217 = scalar_lea.vmem [#allocation8], %s216
        %s218 = smul.u32 16, %s25
        %s219 = smul.u32 16, %s27
        %s220 = smul.u32 2, %s26
        %s221 = smul.u32 16, %s25
        %s222 = smul.u32 2, %s26
        %p223 = scmp.eq.s32.totalorder %s27, 0
        // Predicated region
        $region37: #{tpu_custom_call.1} parent=27 // pred_check
          %p224 = pneg %p223
        $region38: #{tpu_custom_call.1} parent=27 // pred_check_branch
          %226 = sbr.rel (%p224) target = $region40
        $region39: #{tpu_custom_call.1} parent=27 // pred_region
          %227 = vst [vmem:[#allocation2] sm:$0xff] 0.0
          %228 = vst [vmem:[#allocation2 + $0x8] sm:$0xff] 0.0
          %229 = vst [vmem:[#allocation2 + $0x10] sm:$0xff] 0.0
          %230 = vst [vmem:[#allocation2 + $0x18] sm:$0xff] 0.0
          %231 = vst [vmem:[#allocation2 + $0x20] sm:$0xff] 0.0
          %232 = vst [vmem:[#allocation2 + $0x28] sm:$0xff] 0.0
          %233 = vst [vmem:[#allocation2 + $0x30] sm:$0xff] 0.0
          %234 = vst [vmem:[#allocation2 + $0x38] sm:$0xff] 0.0
          %235 = vst [vmem:[#allocation2 + $0x40] sm:$0xff] 0.0
          %236 = vst [vmem:[#allocation2 + $0x48] sm:$0xff] 0.0
          %237 = vst [vmem:[#allocation2 + $0x50] sm:$0xff] 0.0
          %238 = vst [vmem:[#allocation2 + $0x58] sm:$0xff] 0.0
          %239 = vst [vmem:[#allocation2 + $0x60] sm:$0xff] 0.0
          %240 = vst [vmem:[#allocation2 + $0x68] sm:$0xff] 0.0
          %241 = vst [vmem:[#allocation2 + $0x70] sm:$0xff] 0.0
          %242 = vst [vmem:[#allocation2 + $0x78] sm:$0xff] 0.0
          %243 = vst [vmem:[#allocation2 + $0x80] sm:$0xff] 0.0
          %244 = vst [vmem:[#allocation2 + $0x88] sm:$0xff] 0.0
          %245 = vst [vmem:[#allocation2 + $0x90] sm:$0xff] 0.0
          %246 = vst [vmem:[#allocation2 + $0x98] sm:$0xff] 0.0
          %247 = vst [vmem:[#allocation2 + $0xa0] sm:$0xff] 0.0
          %248 = vst [vmem:[#allocation2 + $0xa8] sm:$0xff] 0.0
          %249 = vst [vmem:[#allocation2 + $0xb0] sm:$0xff] 0.0
          %250 = vst [vmem:[#allocation2 + $0xb8] sm:$0xff] 0.0
          %251 = vst [vmem:[#allocation2 + $0xc0] sm:$0xff] 0.0
          %252 = vst [vmem:[#allocation2 + $0xc8] sm:$0xff] 0.0
          %253 = vst [vmem:[#allocation2 + $0xd0] sm:$0xff] 0.0
          %254 = vst [vmem:[#allocation2 + $0xd8] sm:$0xff] 0.0
          %255 = vst [vmem:[#allocation2 + $0xe0] sm:$0xff] 0.0
          %256 = vst [vmem:[#allocation2 + $0xe8] sm:$0xff] 0.0
          %257 = vst [vmem:[#allocation2 + $0xf0] sm:$0xff] 0.0
          %258 = vst [vmem:[#allocation2 + $0xf8] sm:$0xff] 0.0
        $region40: #{tpu_custom_call.1} parent=27 // pred_fallthru
          _
        %v259 = vld [vmem:[#allocation2] sm:$0xff]
        %v260 = vld [vmem:[#allocation2 + $0x8] sm:$0xff]
        %v261 = vld [vmem:[#allocation2 + $0x10] sm:$0xff]
        %v262 = vld [vmem:[#allocation2 + $0x18] sm:$0xff]
        %v263 = vld [vmem:[#allocation2 + $0x20] sm:$0xff]
        %v264 = vld [vmem:[#allocation2 + $0x28] sm:$0xff]
        %v265 = vld [vmem:[#allocation2 + $0x30] sm:$0xff]
        %v266 = vld [vmem:[#allocation2 + $0x38] sm:$0xff]
        %v267 = vld [vmem:[#allocation2 + $0x40] sm:$0xff]
        %v268 = vld [vmem:[#allocation2 + $0x48] sm:$0xff]
        %v269 = vld [vmem:[#allocation2 + $0x50] sm:$0xff]
        %v270 = vld [vmem:[#allocation2 + $0x58] sm:$0xff]
        %v271 = vld [vmem:[#allocation2 + $0x60] sm:$0xff]
        %v272 = vld [vmem:[#allocation2 + $0x68] sm:$0xff]
        %v273 = vld [vmem:[#allocation2 + $0x70] sm:$0xff]
        %v274 = vld [vmem:[#allocation2 + $0x78] sm:$0xff]
        %v275 = vld [vmem:[#allocation2 + $0x80] sm:$0xff]
        %v276 = vld [vmem:[#allocation2 + $0x88] sm:$0xff]
        %v277 = vld [vmem:[#allocation2 + $0x90] sm:$0xff]
        %v278 = vld [vmem:[#allocation2 + $0x98] sm:$0xff]
        %v279 = vld [vmem:[#allocation2 + $0xa0] sm:$0xff]
        %v280 = vld [vmem:[#allocation2 + $0xa8] sm:$0xff]
        %v281 = vld [vmem:[#allocation2 + $0xb0] sm:$0xff]
        %v282 = vld [vmem:[#allocation2 + $0xb8] sm:$0xff]
        %v283 = vld [vmem:[#allocation2 + $0xc0] sm:$0xff]
        %v284 = vld [vmem:[#allocation2 + $0xc8] sm:$0xff]
        %v285 = vld [vmem:[#allocation2 + $0xd0] sm:$0xff]
        %v286 = vld [vmem:[#allocation2 + $0xd8] sm:$0xff]
        %v287 = vld [vmem:[#allocation2 + $0xe0] sm:$0xff]
        %v288 = vld [vmem:[#allocation2 + $0xe8] sm:$0xff]
        %v289 = vld [vmem:[#allocation2 + $0xf0] sm:$0xff]
        %v290 = vld [vmem:[#allocation2 + $0xf8] sm:$0xff]
        %v291 = vld [vmem:[#allocation3] sm:$0xf]
        %v292 = vld [vmem:[#allocation3 + $0x4] sm:$0xf]
        %v293 = vld [vmem:[#allocation3 + $0x8] sm:$0xf]
        %v294 = vld [vmem:[#allocation3 + $0xc] sm:$0xf]
        %v295 = vld [vmem:[#allocation3 + $0x10] sm:$0xf]
        %v296 = vld [vmem:[#allocation3 + $0x14] sm:$0xf]
        %v297 = vld [vmem:[#allocation3 + $0x18] sm:$0xf]
        %v298 = vld [vmem:[#allocation3 + $0x1c] sm:$0xf]
        %v299 = vld [vmem:[#allocation3 + $0x20] sm:$0xf]
        %v300 = vld [vmem:[#allocation3 + $0x24] sm:$0xf]
        %v301 = vld [vmem:[#allocation3 + $0x28] sm:$0xf]
        %v302 = vld [vmem:[#allocation3 + $0x2c] sm:$0xf]
        %v303 = vld [vmem:[#allocation3 + $0x30] sm:$0xf]
        %v304 = vld [vmem:[#allocation3 + $0x34] sm:$0xf]
        %v305 = vld [vmem:[#allocation3 + $0x38] sm:$0xf]
        %v306 = vld [vmem:[#allocation3 + $0x3c] sm:$0xf]
        %v307 = vld [vmem:[%s196] sm:$0xff]
        %v308 = vld [vmem:[%s196 + $0x8] sm:$0xff]
        %v309 = vld [vmem:[%s196 + $0x10] sm:$0xff]
        %v310 = vld [vmem:[%s196 + $0x18] sm:$0xff]
        %v311 = vld [vmem:[%s196 + $0x20] sm:$0xff]
        %v312 = vld [vmem:[%s196 + $0x28] sm:$0xff]
        %v313 = vld [vmem:[%s196 + $0x30] sm:$0xff]
        %v314 = vld [vmem:[%s196 + $0x38] sm:$0xff]
        %v315 = vld [vmem:[%s196 + $0x40] sm:$0xff]
        %v316 = vld [vmem:[%s196 + $0x48] sm:$0xff]
        %v317 = vld [vmem:[%s196 + $0x50] sm:$0xff]
        %v318 = vld [vmem:[%s196 + $0x58] sm:$0xff]
        %v319 = vld [vmem:[%s196 + $0x60] sm:$0xff]
        %v320 = vld [vmem:[%s196 + $0x68] sm:$0xff]
        %v321 = vld [vmem:[%s196 + $0x70] sm:$0xff]
        %v322 = vld [vmem:[%s196 + $0x78] sm:$0xff]
        %v339 = vunpack.c.l.b16 %v291
        %v340 = vunpack.c.l.b16 %v292
        %v341 = vunpack.c.l.b16 %v293
        %v342 = vunpack.c.l.b16 %v294
        %v343 = vunpack.c.l.b16 %v295
        %v344 = vunpack.c.l.b16 %v296
        %v345 = vunpack.c.l.b16 %v297
        %v346 = vunpack.c.l.b16 %v298
        %v347 = vunpack.c.l.b16 %v299
        %v348 = vunpack.c.l.b16 %v300
        %v349 = vunpack.c.l.b16 %v301
        %v350 = vunpack.c.l.b16 %v302
        %v351 = vunpack.c.l.b16 %v303
        %v352 = vunpack.c.l.b16 %v304
        %v353 = vunpack.c.l.b16 %v305
        %v354 = vunpack.c.l.b16 %v306
        %v355 = vpack.c.b16 %v340, %v339
        %v356 = vpack.c.b16 %v342, %v341
        %v357 = vpack.c.b16 %v344, %v343
        %v358 = vpack.c.b16 %v346, %v345
        %v359 = vpack.c.b16 %v348, %v347
        %v360 = vpack.c.b16 %v350, %v349
        %v361 = vpack.c.b16 %v352, %v351
        %v362 = vpack.c.b16 %v354, %v353
        %v387 = vunpack.c.l.b16 %v307
        %v388 = vunpack.c.h.b16 %v307
        %v389 = vunpack.c.l.b16 %v308
        %v390 = vunpack.c.h.b16 %v308
        %v391 = vunpack.c.l.b16 %v309
        %v392 = vunpack.c.h.b16 %v309
        %v393 = vunpack.c.l.b16 %v310
        %v394 = vunpack.c.h.b16 %v310
        %v395 = vunpack.c.l.b16 %v311
        %v396 = vunpack.c.h.b16 %v311
        %v397 = vunpack.c.l.b16 %v312
        %v398 = vunpack.c.h.b16 %v312
        %v399 = vunpack.c.l.b16 %v313
        %v400 = vunpack.c.h.b16 %v313
        %v401 = vunpack.c.l.b16 %v314
        %v402 = vunpack.c.h.b16 %v314
        %v403 = vunpack.c.l.b16 %v315
        %v404 = vunpack.c.h.b16 %v315
        %v405 = vunpack.c.l.b16 %v316
        %v406 = vunpack.c.h.b16 %v316
        %v407 = vunpack.c.l.b16 %v317
        %v408 = vunpack.c.h.b16 %v317
        %v409 = vunpack.c.l.b16 %v318
        %v410 = vunpack.c.h.b16 %v318
        %v411 = vunpack.c.l.b16 %v319
        %v412 = vunpack.c.h.b16 %v319
        %v413 = vunpack.c.l.b16 %v320
        %v414 = vunpack.c.h.b16 %v320
        %v415 = vunpack.c.l.b16 %v321
        %v416 = vunpack.c.h.b16 %v321
        %v417 = vunpack.c.l.b16 %v322
        %v418 = vunpack.c.h.b16 %v322
        %v419 = vpack.c.b16 %v389, %v387
        %v420 = vpack.c.b16 %v390, %v388
        %v421 = vpack.c.b16 %v393, %v391
        %v422 = vpack.c.b16 %v394, %v392
        %v423 = vpack.c.b16 %v397, %v395
        %v424 = vpack.c.b16 %v398, %v396
        %v425 = vpack.c.b16 %v401, %v399
        %v426 = vpack.c.b16 %v402, %v400
        %v427 = vpack.c.b16 %v405, %v403
        %v428 = vpack.c.b16 %v406, %v404
        %v429 = vpack.c.b16 %v409, %v407
        %v430 = vpack.c.b16 %v410, %v408
        %v431 = vpack.c.b16 %v413, %v411
        %v432 = vpack.c.b16 %v414, %v412
        %v433 = vpack.c.b16 %v417, %v415
        %v434 = vpack.c.b16 %v418, %v416
        %451 = vmatpush.bf16.msra.mxu0 %v433
        %452 = vmatpush.bf16.msra.mxu0 %v431
        %453 = vmatpush.bf16.msra.mxu0 %v429
        %454 = vmatpush.bf16.msra.mxu0 %v427
        %455 = vmatpush.bf16.msra.mxu0 %v425
        %456 = vmatpush.bf16.msra.mxu0 %v423
        %457 = vmatpush.bf16.msra.mxu0 %v421
        %458 = vmatpush.bf16.msra.mxu0 %v419
        %459 = vmatmul.bf16.gmra.mxu0 %v355
        %v460 = vpop.f32.mrf.mxu0
        %v461 = vadd.f32 0.0, %v460
        %v462 = vpop.f32.mrf.mxu0
        %v463 = vadd.f32 0.0, %v462
        %464 = vmatmul.bf16.gmra.mxu0 %v356
        %v465 = vpop.f32.mrf.mxu0
        %v466 = vadd.f32 0.0, %v465
        %v467 = vpop.f32.mrf.mxu0
        %v468 = vadd.f32 0.0, %v467
        %469 = vmatmul.bf16.gmra.mxu0 %v357
        %v470 = vpop.f32.mrf.mxu0
        %v471 = vadd.f32 0.0, %v470
        %v472 = vpop.f32.mrf.mxu0
        %v473 = vadd.f32 0.0, %v472
        %474 = vmatmul.bf16.gmra.mxu0 %v358
        %v475 = vpop.f32.mrf.mxu0
        %v476 = vadd.f32 0.0, %v475
        %v477 = vpop.f32.mrf.mxu0
        %v478 = vadd.f32 0.0, %v477
        %479 = vmatmul.bf16.gmra.mxu0 %v359
        %v480 = vpop.f32.mrf.mxu0
        %v481 = vadd.f32 0.0, %v480
        %v482 = vpop.f32.mrf.mxu0
        %v483 = vadd.f32 0.0, %v482
        %484 = vmatmul.bf16.gmra.mxu0 %v360
        %v485 = vpop.f32.mrf.mxu0
        %v486 = vadd.f32 0.0, %v485
        %v487 = vpop.f32.mrf.mxu0
        %v488 = vadd.f32 0.0, %v487
        %489 = vmatmul.bf16.gmra.mxu0 %v361
        %v490 = vpop.f32.mrf.mxu0
        %v491 = vadd.f32 0.0, %v490
        %v492 = vpop.f32.mrf.mxu0
        %v493 = vadd.f32 0.0, %v492
        %494 = vmatmul.bf16.gmra.mxu0 %v362
        %v495 = vpop.f32.mrf.mxu0
        %v496 = vadd.f32 0.0, %v495
        %v497 = vpop.f32.mrf.mxu0
        %v498 = vadd.f32 0.0, %v497
        %499 = vdwg.mxu0
        %500 = vmatpush.bf16.msra.mxu0 %v434
        %501 = vmatpush.bf16.msra.mxu0 %v432
        %502 = vmatpush.bf16.msra.mxu0 %v430
        %503 = vmatpush.bf16.msra.mxu0 %v428
        %504 = vmatpush.bf16.msra.mxu0 %v426
        %505 = vmatpush.bf16.msra.mxu0 %v424
        %506 = vmatpush.bf16.msra.mxu0 %v422
        %507 = vmatpush.bf16.msra.mxu0 %v420
        %508 = vmatmul.bf16.gmra.mxu0 %v355
        %v509 = vpop.f32.mrf.mxu0
        %v510 = vadd.f32 0.0, %v509
        %v511 = vpop.f32.mrf.mxu0
        %v512 = vadd.f32 0.0, %v511
        %513 = vmatmul.bf16.gmra.mxu0 %v356
        %v514 = vpop.f32.mrf.mxu0
        %v515 = vadd.f32 0.0, %v514
        %v516 = vpop.f32.mrf.mxu0
        %v517 = vadd.f32 0.0, %v516
        %518 = vmatmul.bf16.gmra.mxu0 %v357
        %v519 = vpop.f32.mrf.mxu0
        %v520 = vadd.f32 0.0, %v519
        %v521 = vpop.f32.mrf.mxu0
        %v522 = vadd.f32 0.0, %v521
        %523 = vmatmul.bf16.gmra.mxu0 %v358
        %v524 = vpop.f32.mrf.mxu0
        %v525 = vadd.f32 0.0, %v524
        %v526 = vpop.f32.mrf.mxu0
        %v527 = vadd.f32 0.0, %v526
        %528 = vmatmul.bf16.gmra.mxu0 %v359
        %v529 = vpop.f32.mrf.mxu0
        %v530 = vadd.f32 0.0, %v529
        %v531 = vpop.f32.mrf.mxu0
        %v532 = vadd.f32 0.0, %v531
        %533 = vmatmul.bf16.gmra.mxu0 %v360
        %v534 = vpop.f32.mrf.mxu0
        %v535 = vadd.f32 0.0, %v534
        %v536 = vpop.f32.mrf.mxu0
        %v537 = vadd.f32 0.0, %v536
        %538 = vmatmul.bf16.gmra.mxu0 %v361
        %v539 = vpop.f32.mrf.mxu0
        %v540 = vadd.f32 0.0, %v539
        %v541 = vpop.f32.mrf.mxu0
        %v542 = vadd.f32 0.0, %v541
        %543 = vmatmul.bf16.gmra.mxu0 %v362
        %v544 = vpop.f32.mrf.mxu0
        %v545 = vadd.f32 0.0, %v544
        %v546 = vpop.f32.mrf.mxu0
        %v547 = vadd.f32 0.0, %v546
        %548 = vdwg.mxu0
        %v549 = vadd.f32 %v259, %v461
        %v550 = vadd.f32 %v260, %v510
        %v551 = vadd.f32 %v261, %v463
        %v552 = vadd.f32 %v262, %v512
        %v553 = vadd.f32 %v263, %v466
        %v554 = vadd.f32 %v264, %v515
        %v555 = vadd.f32 %v265, %v468
        %v556 = vadd.f32 %v266, %v517
        %v557 = vadd.f32 %v267, %v471
        %v558 = vadd.f32 %v268, %v520
        %v559 = vadd.f32 %v269, %v473
        %v560 = vadd.f32 %v270, %v522
        %v561 = vadd.f32 %v271, %v476
        %v562 = vadd.f32 %v272, %v525
        %v563 = vadd.f32 %v273, %v478
        %v564 = vadd.f32 %v274, %v527
        %v565 = vadd.f32 %v275, %v481
        %v566 = vadd.f32 %v276, %v530
        %v567 = vadd.f32 %v277, %v483
        %v568 = vadd.f32 %v278, %v532
        %v569 = vadd.f32 %v279, %v486
        %v570 = vadd.f32 %v280, %v535
        %v571 = vadd.f32 %v281, %v488
        %v572 = vadd.f32 %v282, %v537
        %v573 = vadd.f32 %v283, %v491
        %v574 = vadd.f32 %v284, %v540
        %v575 = vadd.f32 %v285, %v493
        %v576 = vadd.f32 %v286, %v542
        %v577 = vadd.f32 %v287, %v496
        %v578 = vadd.f32 %v288, %v545
        %v579 = vadd.f32 %v289, %v498
        %v580 = vadd.f32 %v290, %v547
        %581 = vst [vmem:[#allocation2] sm:$0xff] %v549
        %582 = vst [vmem:[#allocation2 + $0x8] sm:$0xff] %v550
        %583 = vst [vmem:[#allocation2 + $0x10] sm:$0xff] %v551
        %584 = vst [vmem:[#allocation2 + $0x18] sm:$0xff] %v552
        %585 = vst [vmem:[#allocation2 + $0x20] sm:$0xff] %v553
        %586 = vst [vmem:[#allocation2 + $0x28] sm:$0xff] %v554
        %587 = vst [vmem:[#allocation2 + $0x30] sm:$0xff] %v555
        %588 = vst [vmem:[#allocation2 + $0x38] sm:$0xff] %v556
        %589 = vst [vmem:[#allocation2 + $0x40] sm:$0xff] %v557
        %590 = vst [vmem:[#allocation2 + $0x48] sm:$0xff] %v558
        %591 = vst [vmem:[#allocation2 + $0x50] sm:$0xff] %v559
        %592 = vst [vmem:[#allocation2 + $0x58] sm:$0xff] %v560
        %593 = vst [vmem:[#allocation2 + $0x60] sm:$0xff] %v561
        %594 = vst [vmem:[#allocation2 + $0x68] sm:$0xff] %v562
        %595 = vst [vmem:[#allocation2 + $0x70] sm:$0xff] %v563
        %596 = vst [vmem:[#allocation2 + $0x78] sm:$0xff] %v564
        %597 = vst [vmem:[#allocation2 + $0x80] sm:$0xff] %v565
        %598 = vst [vmem:[#allocation2 + $0x88] sm:$0xff] %v566
        %599 = vst [vmem:[#allocation2 + $0x90] sm:$0xff] %v567
        %600 = vst [vmem:[#allocation2 + $0x98] sm:$0xff] %v568
        %601 = vst [vmem:[#allocation2 + $0xa0] sm:$0xff] %v569
        %602 = vst [vmem:[#allocation2 + $0xa8] sm:$0xff] %v570
        %603 = vst [vmem:[#allocation2 + $0xb0] sm:$0xff] %v571
        %604 = vst [vmem:[#allocation2 + $0xb8] sm:$0xff] %v572
        %605 = vst [vmem:[#allocation2 + $0xc0] sm:$0xff] %v573
        %606 = vst [vmem:[#allocation2 + $0xc8] sm:$0xff] %v574
        %607 = vst [vmem:[#allocation2 + $0xd0] sm:$0xff] %v575
        %608 = vst [vmem:[#allocation2 + $0xd8] sm:$0xff] %v576
        %609 = vst [vmem:[#allocation2 + $0xe0] sm:$0xff] %v577
        %610 = vst [vmem:[#allocation2 + $0xe8] sm:$0xff] %v578
        %611 = vst [vmem:[#allocation2 + $0xf0] sm:$0xff] %v579
        %612 = vst [vmem:[#allocation2 + $0xf8] sm:$0xff] %v580
        // Predicated region
        $region41: #{tpu_custom_call.1} parent=27 // pred_check
          %p613 = pneg %p223
        $region42: #{tpu_custom_call.1} parent=27 // pred_check_branch
          %615 = sbr.rel (%p613) target = $region44
        $region43: #{tpu_custom_call.1} parent=27 // pred_region
          %v616 = vld [vmem:[#allocation2] sm:$0xff]
          %v617 = vld [vmem:[#allocation2 + $0x8] sm:$0xff]
          %v618 = vld [vmem:[#allocation2 + $0x10] sm:$0xff]
          %v619 = vld [vmem:[#allocation2 + $0x18] sm:$0xff]
          %v620 = vld [vmem:[#allocation2 + $0x20] sm:$0xff]
          %v621 = vld [vmem:[#allocation2 + $0x28] sm:$0xff]
          %v622 = vld [vmem:[#allocation2 + $0x30] sm:$0xff]
          %v623 = vld [vmem:[#allocation2 + $0x38] sm:$0xff]
          %v624 = vld [vmem:[#allocation2 + $0x40] sm:$0xff]
          %v625 = vld [vmem:[#allocation2 + $0x48] sm:$0xff]
          %v626 = vld [vmem:[#allocation2 + $0x50] sm:$0xff]
          %v627 = vld [vmem:[#allocation2 + $0x58] sm:$0xff]
          %v628 = vld [vmem:[#allocation2 + $0x60] sm:$0xff]
          %v629 = vld [vmem:[#allocation2 + $0x68] sm:$0xff]
          %v630 = vld [vmem:[#allocation2 + $0x70] sm:$0xff]
          %v631 = vld [vmem:[#allocation2 + $0x78] sm:$0xff]
          %v632 = vld [vmem:[#allocation2 + $0x80] sm:$0xff]
          %v633 = vld [vmem:[#allocation2 + $0x88] sm:$0xff]
          %v634 = vld [vmem:[#allocation2 + $0x90] sm:$0xff]
          %v635 = vld [vmem:[#allocation2 + $0x98] sm:$0xff]
          %v636 = vld [vmem:[#allocation2 + $0xa0] sm:$0xff]
          %v637 = vld [vmem:[#allocation2 + $0xa8] sm:$0xff]
          %v638 = vld [vmem:[#allocation2 + $0xb0] sm:$0xff]
          %v639 = vld [vmem:[#allocation2 + $0xb8] sm:$0xff]
          %v640 = vld [vmem:[#allocation2 + $0xc0] sm:$0xff]
          %v641 = vld [vmem:[#allocation2 + $0xc8] sm:$0xff]
          %v642 = vld [vmem:[#allocation2 + $0xd0] sm:$0xff]
          %v643 = vld [vmem:[#allocation2 + $0xd8] sm:$0xff]
          %v644 = vld [vmem:[#allocation2 + $0xe0] sm:$0xff]
          %v645 = vld [vmem:[#allocation2 + $0xe8] sm:$0xff]
          %v646 = vld [vmem:[#allocation2 + $0xf0] sm:$0xff]
          %v647 = vld [vmem:[#allocation2 + $0xf8] sm:$0xff]
          %v648 = vpack.c.bf16 %v617, %v616
          %v649 = vpack.c.bf16 %v619, %v618
          %v650 = vpack.c.bf16 %v621, %v620
          %v651 = vpack.c.bf16 %v623, %v622
          %v652 = vpack.c.bf16 %v625, %v624
          %v653 = vpack.c.bf16 %v627, %v626
          %v654 = vpack.c.bf16 %v629, %v628
          %v655 = vpack.c.bf16 %v631, %v630
          %v656 = vpack.c.bf16 %v633, %v632
          %v657 = vpack.c.bf16 %v635, %v634
          %v658 = vpack.c.bf16 %v637, %v636
          %v659 = vpack.c.bf16 %v639, %v638
          %v660 = vpack.c.bf16 %v641, %v640
          %v661 = vpack.c.bf16 %v643, %v642
          %v662 = vpack.c.bf16 %v645, %v644
          %v663 = vpack.c.bf16 %v647, %v646
          %664 = vst [vmem:[%s217] sm:$0xff] %v648
          %665 = vst [vmem:[%s217 + $0x8] sm:$0xff] %v649
          %666 = vst [vmem:[%s217 + $0x10] sm:$0xff] %v650
          %667 = vst [vmem:[%s217 + $0x18] sm:$0xff] %v651
          %668 = vst [vmem:[%s217 + $0x20] sm:$0xff] %v652
          %669 = vst [vmem:[%s217 + $0x28] sm:$0xff] %v653
          %670 = vst [vmem:[%s217 + $0x30] sm:$0xff] %v654
          %671 = vst [vmem:[%s217 + $0x38] sm:$0xff] %v655
          %672 = vst [vmem:[%s217 + $0x40] sm:$0xff] %v656
          %673 = vst [vmem:[%s217 + $0x48] sm:$0xff] %v657
          %674 = vst [vmem:[%s217 + $0x50] sm:$0xff] %v658
          %675 = vst [vmem:[%s217 + $0x58] sm:$0xff] %v659
          %676 = vst [vmem:[%s217 + $0x60] sm:$0xff] %v660
          %677 = vst [vmem:[%s217 + $0x68] sm:$0xff] %v661
          %678 = vst [vmem:[%s217 + $0x70] sm:$0xff] %v662
          %679 = vst [vmem:[%s217 + $0x78] sm:$0xff] %v663
        $region44: #{tpu_custom_call.1} parent=27 // pred_fallthru
          _
        %s680 = sand.u32 %s105, 1
        %s681 = scalar_lea.sflag [#allocation5], %s680
        %s682 = sand.u32 %s105, 1
        %s683 = smul.addr %s682, 128
        %s684 = scalar_lea.vmem [#allocation8], %s683
        // Predicated region
        $region45: #{tpu_custom_call.1} parent=27 // pred_check
          %p685 = pneg %p115
        $region46: #{tpu_custom_call.1} parent=27 // pred_check_branch
          %687 = sbr.rel (%p685) target = $region48
        $region47: #{tpu_custom_call.1} parent=27 // pred_region
          %s688 = smul.u32 16, %s25
          %s689 = smul.u32 2, %s26
          %691 = vsyncadd %s681, 0
          %s692 = smul.addr %s688, 4
          %s693 = sadd.s32 %s689, %s692
          %s694 = smul.addr %s693, 4
          %s695 = scalar_lea.hbm %s2, %s694
          %s696 = sshll.u32 %s684, 4
          %s697 = int_to_ptr.vmem [resolvable:$true] %s696
          %s698 = sshll.u32 %s695, 4
          %s699 = int_to_ptr.hbm [resolvable:$true] %s698
          %704 = dma.vmem_to_hbm [thread:$0]  %s697, 2048, %s699, %s681, 128, 256, 8
        $region48: #{tpu_custom_call.1} parent=27 // pred_fallthru
          _
      $region28: #{tpu_custom_call.1} parent=5 // pred_fallthru
        _
      %p705 = scmp.le.s32.totalorder 2, %s15
      // Predicated region
      $region49: #{tpu_custom_call.1} parent=5 // pred_check
        %p706 = pneg %p705
      $region50: #{tpu_custom_call.1} parent=5 // pred_check_branch
        %708 = sbr.rel (%p706) target = $region52
      $region51: #{tpu_custom_call.1} parent=5 // pred_region
        %s709 = ssub.s32 %s15, 2
        // Predicated region
        $region53: #{tpu_custom_call.1} parent=51 // pred_check
          %p710 = pneg %p121
        $region54: #{tpu_custom_call.1} parent=51 // pred_check_branch
          %712 = sbr.rel (%p710) target = $region56
        $region55: #{tpu_custom_call.1} parent=51 // pred_region
          %s713 = sand.u32 %s106, 1
          %s714 = scalar_lea.sflag [#allocation5], %s713
          %s715 = sand.u32 %s106, 1
          %s716 = smul.addr %s715, 128
          %s717 = scalar_lea.vmem [#allocation8], %s716
          %719 = dma.done %s714, 2048
        $region56: #{tpu_custom_call.1} parent=51 // pred_fallthru
          _
      $region52: #{tpu_custom_call.1} parent=5 // pred_fallthru
        _
    $region6: #{tpu_custom_call.1} parent=1 // loop_footer
      %s19 = sadd.s32 1, %s15
    $region7: #{tpu_custom_call.1} parent=1 // loop_footer_branch
      %14 = sbr.rel target = $region3
    $region8: #{tpu_custom_call.1} parent=1 // loop_exit
      _
    %720 = vsyncpa [#allocation4], 1
    %s721 = scalar_lea.sflag [#allocation4], 1
    %722 = vsyncpa %s721, 1
    %723 = vsyncpa [#allocation7], 1
    %s724 = scalar_lea.sflag [#allocation7], 1
    %725 = vsyncpa %s724, 1
    %726 = vsyncpa [#allocation5], 1
    %s727 = scalar_lea.sflag [#allocation5], 1
    %728 = vsyncpa %s727, 1

</llo_original>
